<compile_context>
chip_gen: v7x
topology: tpu7x:2x2x1
jax: 0.10.0
libtpu: 0.0.40
codegen_flags: <defaults>
</compile_context>

<pallas_src>
import functools

import jax
import jax.numpy as jnp
from jax.experimental import pallas as pl
from jax.experimental.pallas import tpu as pltpu


def _round_up(x, m):
    return ((x + m - 1) // m) * m


def _cdiv(a, b):
    return (a + b - 1) // b


def _pconv_kernel(xm_ref, xh_ref, w_ref, o_ref, xext_ref, col_ref, *, K, Wp, C1p):
    """xm_ref : (C1p, Lt)        main lane tile of the packed/padded conv half
       xh_ref : (C1p, halo)      halo lanes (start of the next tile)
       w_ref  : (C1p, K*K*C1p)   tap-stacked weights  [out, (tap, in)]
       o_ref  : (C1p, Lt)        conv output tile (flat, padded-width coords)
       xext_ref: (C1p, Lt+halo)  VMEM scratch: tile + halo stitched together
       col_ref : (K*K*C1p, Lt)   VMEM scratch: im2col slab"""
    lt = o_ref.shape[-1]
    # Stitch tile + halo so every shifted im2col read stays inside VMEM.
    xext_ref[:, :lt] = xm_ref[...]
    xext_ref[:, lt:] = xh_ref[...]
    # Build the tap-stacked im2col slab (K*K static lane-shifted copies).
    # TODO(synk): for large W, pad each row to a lane multiple so dy*Wp offsets
    # are 128-aligned and these copies become plain (unshifted) vector loads.
    for dy in range(K):
        for dx in range(K):
            tap = dy * K + dx
            off = dy * Wp + dx
            col_ref[tap * C1p:(tap + 1) * C1p, :] = xext_ref[:, off:off + lt]
    # Single MXU matmul with f32 accumulation (contraction depth = K*K*C1p).
    o_ref[...] = jnp.dot(w_ref[...], col_ref[...],
                         preferred_element_type=jnp.float32).astype(o_ref.dtype)


def _choose_lane_tile(ltot, halo, target=2048):
    """Lane tile: a multiple of `halo` (itself a multiple of 128), ~`target`
    lanes, and >=2 grid steps when possible (keeps both v7x TCs busy)."""
    lt = _round_up(min(max(target, halo), _round_up(ltot, halo)), halo)
    nt = _cdiv(ltot, lt)
    if nt < 2 and ltot > halo:
        lt = _round_up(_cdiv(ltot, 2), halo)
        nt = _cdiv(ltot, lt)
    return lt, nt


@functools.partial(jax.jit, static_argnames=("n_div", "compute_dtype"))
def pconv2_1(x, w, *, n_div=2, compute_dtype=jnp.bfloat16):
    """x: (N, C, H, W). w: (C1, C1, K, K) torch Conv2d weight (out, in, kh, kw)
    with C1 = C // n_div, no bias. Returns concat([conv(x1), x2], axis=1)."""
    N, C, H, W = x.shape
    C1 = C // n_div
    C_out, C_in, K, K2 = w.shape
    assert K == K2 and C_out == C1 and C_in == C1
    pad = (K - 1) // 2
    Hp, Wp = H + 2 * pad, W + 2 * pad
    KK = K * K

    x1, x2 = x[:, :C1], x[:, C1:]

    # Channel pad to the sublane-packing multiple (16 for bf16, 8 for f32).
    cpad = 16 if jnp.dtype(compute_dtype).itemsize == 2 else 8
    C1p = _round_up(max(C1, cpad), cpad)

    # Flat lane geometry: all images packed back-to-back (each zero-framed);
    # lane tiles of Lt plus a `halo` of extra lanes for the shifted taps.
    off_max = (K - 1) * Wp + (K - 1)
    halo = _round_up(off_max, 128)
    Ltot = N * Hp * Wp
    Lt, n_t = _choose_lane_tile(Ltot, halo)
    Lout = n_t * Lt
    Lin = Lout + halo

    # Zero-frame, flatten, pack along the lane axis: (C1p, N*Hp*Wp), then pad
    # the lane tail so the last tile's halo reads stay in bounds (zeros).
    x1p = jnp.pad(x1, ((0, 0), (0, C1p - C1), (pad, pad), (pad, pad)))
    xf = jnp.transpose(x1p, (1, 0, 2, 3)).reshape(C1p, Ltot).astype(compute_dtype)
    xf = jnp.pad(xf, ((0, 0), (0, Lin - Ltot)))

    # Tap-stacked weights: w[o, c, dy, dx] -> w_r[o, (dy*K+dx)*C1p + c].
    w_p = jnp.pad(w, ((0, C1p - C1), (0, C1p - C1), (0, 0), (0, 0)))
    w_r = jnp.transpose(w_p, (0, 2, 3, 1)).reshape(C1p, KK * C1p).astype(compute_dtype)

    out_dtype = x.dtype
    bpe_c = jnp.dtype(compute_dtype).itemsize
    bpe_o = jnp.dtype(out_dtype).itemsize

    # VMEM budget from the actual block sizes (double-buffered ins/outs + scratch).
    vmem_needed = (
        2 * (C1p * Lt + C1p * halo + C1p * KK * C1p) * bpe_c
        + 2 * (C1p * Lt) * bpe_o
        + (C1p * (Lt + halo) + KK * C1p * Lt) * bpe_c)
    vmem_limit = int(min(64 * 1024 * 1024, max(8 * 1024 * 1024, 2 * vmem_needed)))

    cost = pl.CostEstimate(
        flops=2 * N * C1 * C1 * KK * H * W,
        transcendentals=0,
        bytes_accessed=int((C1p * Lin + C1p * KK * C1p) * bpe_c
                           + C1p * Lout * bpe_o))

    kernel = functools.partial(_pconv_kernel, K=K, Wp=Wp, C1p=C1p)
    lt_blocks = Lt // halo  # halo block index stride (Lt is a multiple of halo)

    y1f = pl.pallas_call(
        kernel,
        out_shape=jax.ShapeDtypeStruct((C1p, Lout), out_dtype),
        grid=(n_t,),
        in_specs=[
            pl.BlockSpec((C1p, Lt), lambda t: (0, t)),                      # tile
            pl.BlockSpec((C1p, halo), lambda t: (0, (t + 1) * lt_blocks)),  # halo
            pl.BlockSpec((C1p, KK * C1p), lambda t: (0, 0)),                # weights
        ],
        out_specs=pl.BlockSpec((C1p, Lt), lambda t: (0, t)),
        scratch_shapes=[
            pltpu.VMEM((C1p, Lt + halo), compute_dtype),   # stitched tile+halo
            pltpu.VMEM((KK * C1p, Lt), compute_dtype),     # im2col slab
        ],
        compiler_params=pltpu.CompilerParams(
            dimension_semantics=("parallel",),
            vmem_limit_bytes=vmem_limit),
        cost_estimate=cost,
    )(xf, xf, w_r)

    # De-pad: drop lane tail, padded channels, and the zero-frame rows/cols;
    # restore NCHW.  (Garbage positions — frame columns/rows and cross-image
    # reads — are exactly the positions dropped here.)
    y1 = y1f[:C1, :Ltot].reshape(C1, N, Hp, Wp)[:, :, :H, :W]
    y1 = jnp.transpose(y1, (1, 0, 2, 3))
    # Untouched half is concatenated back (XLA fuses this plumbing under jit).
    return jnp.concatenate([y1, x2], axis=1)


if __name__ == "__main__":
    # Small shapes consistent with the module: batch=2, channels=4, 16x16.
    N, C, H, W = 2, 4, 16, 16
    K = 3
    C1 = C // 2

    key = jax.random.PRNGKey(0)
    kx, kw = jax.random.split(key)
    x = jax.random.normal(kx, (N, C, H, W), dtype=jnp.float32)
    w = jax.random.normal(kw, (C1, C1, K, K), dtype=jnp.float32) * 0.1

    out = jax.block_until_ready(pconv2_1(x, w))

    # Reference: torch-equivalent partial conv (cross-correlation, zero pad).
    ref1 = jax.lax.conv_general_dilated(
        x[:, :C1], w, window_strides=(1, 1), padding="SAME",
        dimension_numbers=("NCHW", "OIHW", "NCHW"),
        precision=jax.lax.Precision.HIGHEST)
    ref = jnp.concatenate([ref1, x[:, C1:]], axis=1)

    assert out.shape == (N, C, H, W)
    # Tolerance covers bf16 MXU operands (f32 accumulation) vs f32 reference.
    assert bool(jnp.allclose(out, ref, atol=2e-2, rtol=2e-2)), \
        "mismatch vs JAX reference"
    print("KERNEL_OK")
</pallas_src>

<mosaic_0001>
module attributes {stable_mosaic.version = 11 : i64} {
  func.func @_pconv_kernel(%arg0: i32, %arg1: memref<16x384xbf16, #tpu.memory_space<vmem>>, %arg2: memref<16x128xbf16, #tpu.memory_space<vmem>>, %arg3: memref<16x144xbf16, #tpu.memory_space<vmem>>, %arg4: memref<16x384xf32, #tpu.memory_space<vmem>>, %arg5: memref<16x512xbf16, #tpu.memory_space<vmem>>, %arg6: memref<144x384xbf16, #tpu.memory_space<vmem>>) attributes {dimension_semantics = [#tpu.dimension_semantics<parallel>], iteration_bounds = array<i64: 2>, scalar_prefetch = 0 : i64, scratch_operands = 2 : i64, tpu.core_type = #tpu.core_type<tc>, window_params = [{transform_indices = @transform_0, window_bounds = array<i64: 16, 384>}, {transform_indices = @transform_1, window_bounds = array<i64: 16, 128>}, {pipeline_mode = #tpu.pipeline_mode<synchronous>, transform_indices = @transform_2, window_bounds = array<i64: 16, 144>}, {transform_indices = @transform_3, window_bounds = array<i64: 16, 384>}]} {
    %c0 = arith.constant 0 : index
    %c0_0 = arith.constant 0 : index
    %0 = vector.load %arg1[%c0, %c0_0] : memref<16x384xbf16, #tpu.memory_space<vmem>>, vector<16x384xbf16>
    %c0_1 = arith.constant 0 : index
    %c0_2 = arith.constant 0 : index
    %1 = vector.load %arg5[%c0_1, %c0_2] : memref<16x512xbf16, #tpu.memory_space<vmem>>, vector<16x384xbf16>
    tpu.vector_store %arg5[%c0_1, %c0_2], %0 {strides = array<i32>} : memref<16x512xbf16, #tpu.memory_space<vmem>>, vector<16x384xbf16>,
    %c0_3 = arith.constant 0 : index
    %c0_4 = arith.constant 0 : index
    %2 = vector.load %arg2[%c0_3, %c0_4] : memref<16x128xbf16, #tpu.memory_space<vmem>>, vector<16x128xbf16>
    %c0_5 = arith.constant 0 : index
    %c384 = arith.constant 384 : index
    %3 = vector.load %arg5[%c0_5, %c384] : memref<16x512xbf16, #tpu.memory_space<vmem>>, vector<16x128xbf16>
    tpu.vector_store %arg5[%c0_5, %c384], %2 {strides = array<i32>} : memref<16x512xbf16, #tpu.memory_space<vmem>>, vector<16x128xbf16>,
    %c0_6 = arith.constant 0 : index
    %c0_7 = arith.constant 0 : index
    %4 = vector.load %arg5[%c0_6, %c0_7] : memref<16x512xbf16, #tpu.memory_space<vmem>>, vector<16x384xbf16>
    %c0_8 = arith.constant 0 : index
    %c0_9 = arith.constant 0 : index
    %5 = vector.load %arg6[%c0_8, %c0_9] : memref<144x384xbf16, #tpu.memory_space<vmem>>, vector<16x384xbf16>
    tpu.vector_store %arg6[%c0_8, %c0_9], %4 {strides = array<i32>} : memref<144x384xbf16, #tpu.memory_space<vmem>>, vector<16x384xbf16>,
    %c0_10 = arith.constant 0 : index
    %c1 = arith.constant 1 : index
    %6 = vector.load %arg5[%c0_10, %c1] : memref<16x512xbf16, #tpu.memory_space<vmem>>, vector<16x384xbf16>
    %c16 = arith.constant 16 : index
    %c0_11 = arith.constant 0 : index
    %7 = vector.load %arg6[%c16, %c0_11] : memref<144x384xbf16, #tpu.memory_space<vmem>>, vector<16x384xbf16>
    tpu.vector_store %arg6[%c16, %c0_11], %6 {strides = array<i32>} : memref<144x384xbf16, #tpu.memory_space<vmem>>, vector<16x384xbf16>,
    %c0_12 = arith.constant 0 : index
    %c2 = arith.constant 2 : index
    %8 = vector.load %arg5[%c0_12, %c2] : memref<16x512xbf16, #tpu.memory_space<vmem>>, vector<16x384xbf16>
    %c32 = arith.constant 32 : index
    %c0_13 = arith.constant 0 : index
    %9 = vector.load %arg6[%c32, %c0_13] : memref<144x384xbf16, #tpu.memory_space<vmem>>, vector<16x384xbf16>
    tpu.vector_store %arg6[%c32, %c0_13], %8 {strides = array<i32>} : memref<144x384xbf16, #tpu.memory_space<vmem>>, vector<16x384xbf16>,
    %c0_14 = arith.constant 0 : index
    %c18 = arith.constant 18 : index
    %10 = vector.load %arg5[%c0_14, %c18] : memref<16x512xbf16, #tpu.memory_space<vmem>>, vector<16x384xbf16>
    %c48 = arith.constant 48 : index
    %c0_15 = arith.constant 0 : index
    %11 = vector.load %arg6[%c48, %c0_15] : memref<144x384xbf16, #tpu.memory_space<vmem>>, vector<16x384xbf16>
    tpu.vector_store %arg6[%c48, %c0_15], %10 {strides = array<i32>} : memref<144x384xbf16, #tpu.memory_space<vmem>>, vector<16x384xbf16>,
    %c0_16 = arith.constant 0 : index
    %c19 = arith.constant 19 : index
    %12 = vector.load %arg5[%c0_16, %c19] : memref<16x512xbf16, #tpu.memory_space<vmem>>, vector<16x384xbf16>
    %c64 = arith.constant 64 : index
    %c0_17 = arith.constant 0 : index
    %13 = vector.load %arg6[%c64, %c0_17] : memref<144x384xbf16, #tpu.memory_space<vmem>>, vector<16x384xbf16>
    tpu.vector_store %arg6[%c64, %c0_17], %12 {strides = array<i32>} : memref<144x384xbf16, #tpu.memory_space<vmem>>, vector<16x384xbf16>,
    %c0_18 = arith.constant 0 : index
    %c20 = arith.constant 20 : index
    %14 = vector.load %arg5[%c0_18, %c20] : memref<16x512xbf16, #tpu.memory_space<vmem>>, vector<16x384xbf16>
    %c80 = arith.constant 80 : index
    %c0_19 = arith.constant 0 : index
    %15 = vector.load %arg6[%c80, %c0_19] : memref<144x384xbf16, #tpu.memory_space<vmem>>, vector<16x384xbf16>
    tpu.vector_store %arg6[%c80, %c0_19], %14 {strides = array<i32>} : memref<144x384xbf16, #tpu.memory_space<vmem>>, vector<16x384xbf16>,
    %c0_20 = arith.constant 0 : index
    %c36 = arith.constant 36 : index
    %16 = vector.load %arg5[%c0_20, %c36] : memref<16x512xbf16, #tpu.memory_space<vmem>>, vector<16x384xbf16>
    %c96 = arith.constant 96 : index
    %c0_21 = arith.constant 0 : index
    %17 = vector.load %arg6[%c96, %c0_21] : memref<144x384xbf16, #tpu.memory_space<vmem>>, vector<16x384xbf16>
    tpu.vector_store %arg6[%c96, %c0_21], %16 {strides = array<i32>} : memref<144x384xbf16, #tpu.memory_space<vmem>>, vector<16x384xbf16>,
    %c0_22 = arith.constant 0 : index
    %c37 = arith.constant 37 : index
    %18 = vector.load %arg5[%c0_22, %c37] : memref<16x512xbf16, #tpu.memory_space<vmem>>, vector<16x384xbf16>
    %c112 = arith.constant 112 : index
    %c0_23 = arith.constant 0 : index
    %19 = vector.load %arg6[%c112, %c0_23] : memref<144x384xbf16, #tpu.memory_space<vmem>>, vector<16x384xbf16>
    tpu.vector_store %arg6[%c112, %c0_23], %18 {strides = array<i32>} : memref<144x384xbf16, #tpu.memory_space<vmem>>, vector<16x384xbf16>,
    %c0_24 = arith.constant 0 : index
    %c38 = arith.constant 38 : index
    %20 = vector.load %arg5[%c0_24, %c38] : memref<16x512xbf16, #tpu.memory_space<vmem>>, vector<16x384xbf16>
    %c128 = arith.constant 128 : index
    %c0_25 = arith.constant 0 : index
    %21 = vector.load %arg6[%c128, %c0_25] : memref<144x384xbf16, #tpu.memory_space<vmem>>, vector<16x384xbf16>
    tpu.vector_store %arg6[%c128, %c0_25], %20 {strides = array<i32>} : memref<144x384xbf16, #tpu.memory_space<vmem>>, vector<16x384xbf16>,
    %c0_26 = arith.constant 0 : index
    %c0_27 = arith.constant 0 : index
    %22 = vector.load %arg3[%c0_26, %c0_27] : memref<16x144xbf16, #tpu.memory_space<vmem>>, vector<16x144xbf16>
    %c0_28 = arith.constant 0 : index
    %c0_29 = arith.constant 0 : index
    %23 = vector.load %arg6[%c0_28, %c0_29] : memref<144x384xbf16, #tpu.memory_space<vmem>>, vector<144x384xbf16>
    %cst = arith.constant dense<0.000000e+00> : vector<16x384xf32>
    %24 = tpu.matmul %22, %23, %cst {dimension_numbers = #tpu.dot_dimension_numbers<[1], [0], [0], [1], [0, 0, 1, 1], [], []>} : vector<16x144xbf16>, vector<144x384xbf16>, vector<16x384xf32> -> vector<16x384xf32>
    %c0_30 = arith.constant 0 : index
    %c0_31 = arith.constant 0 : index
    %25 = vector.load %arg4[%c0_30, %c0_31] : memref<16x384xf32, #tpu.memory_space<vmem>>, vector<16x384xf32>
    tpu.vector_store %arg4[%c0_30, %c0_31], %24 {strides = array<i32>} : memref<16x384xf32, #tpu.memory_space<vmem>>, vector<16x384xf32>,
    return
  }
  func.func @transform_0(%arg0: i32) -> (i32, i32) {
    %c0_i32 = arith.constant 0 : i32
    %c0_i32_0 = arith.constant 0 : i32
    return %c0_i32, %arg0 : i32, i32
  }
  func.func @transform_1(%arg0: i32) -> (i32, i32) {
    %c1_i32 = arith.constant 1 : i32
    %0 = arith.addi %arg0, %c1_i32 : i32
    %c3_i32 = arith.constant 3 : i32
    %1 = arith.muli %0, %c3_i32 : i32
    %c0_i32 = arith.constant 0 : i32
    %c0_i32_0 = arith.constant 0 : i32
    return %c0_i32, %1 : i32, i32
  }
  func.func @transform_2(%arg0: i32) -> (i32, i32) {
    %c0_i32 = arith.constant 0 : i32
    %c0_i32_0 = arith.constant 0 : i32
    %c0_i32_1 = arith.constant 0 : i32
    return %c0_i32, %c0_i32_0 : i32, i32
  }
  func.func @transform_3(%arg0: i32) -> (i32, i32) {
    %c0_i32 = arith.constant 0 : i32
    %c0_i32_0 = arith.constant 0 : i32
    return %c0_i32, %arg0 : i32, i32
  }
}

</mosaic_0001>

<llo_original>
// kernel: pconv2_1.1
$region0: #{pconv2_1.1}
  #allocation0 [shape = 'u32[]', space=smem, size = 0x4, offset = 0x4, fixed_abs, tag = 'smem constant byte address 0x4 - core index']
  #allocation1 [shape = 'u32[144,128]{1,0:T(1,128)}', space=vmem, size = 0x12000, scoped, tag = 'internal scratch']
  #allocation2 [shape = 'bf16[16,512]{1,0:T(16,128)(2,1)}', space=vmem, size = 0x4000, scoped, tag = 'scratch operand']
  #allocation3 [shape = 'bf16[144,384]{1,0:T(16,128)(2,1)}', space=vmem, size = 0x1b000, scoped, tag = 'scratch operand']
  %s0 = inlined_call_operand.vmem [shape: bf16[16,896], index: 0, kind: input, shape index: {}, may-alias: {0,1}]
  %s1 = inlined_call_operand.vmem [shape: bf16[16,896], index: 1, kind: input, shape index: {}, may-alias: {0,1}]
  %s2 = inlined_call_operand.vmem [shape: bf16[16,144], index: 2, kind: input, shape index: {}]
  %s3 = inlined_call_operand.vmem [shape: f32[16,768], index: 3, kind: output, shape index: {}]
  %s4 = sld [smem:[#allocation0]]
  $region171: #{pconv2_1.1} parent=0
    _
  %s6 = ssub.s32 1, %s4
  %s7 = scalar_select 0, %s6, %s4
  $region1: #{pconv2_1.1} parent=0
    #allocation4 [shape = 'u8[24576]{0}', space=vmem, size = 0x6000, scoped, tag = 'input window, operand 0']
    #allocation5 [shape = 'u8[8192]{0}', space=vmem, size = 0x2000, scoped, tag = 'input window, operand 1']
    #allocation6 [shape = 'u8[49152]{0}', space=vmem, size = 0xc000, scoped, tag = 'output window, operand 0']
    loop: start=0, step=1, limit=4
    $region2: #{pconv2_1.1} parent=1 // loop_pre_header
      _
    $region3: #{pconv2_1.1} parent=1 // loop_header
      %s9 = sphi 0, %s13
      %p10 = scmp.ge.s32.totalorder %s9, 4
      %s19 = sphi 0, %s21
      %s22 = sphi 0, %s19
      %s23 = sphi 0, %s22
      %s39 = sphi 0, %s23
      %s49 = sphi 0, %s51
      %s52 = sphi 0, %s49
      %s53 = sphi 0, %s52
      %s69 = sphi 0, %s53
      %s73 = sphi 0, %s73
      %s75 = sphi 0, %s73
      %s76 = sphi 0, %s75
      %s90 = sphi 0, %s76
      %s96 = sphi 0, %s98
      %s99 = sphi 0, %s96
      %s100 = sphi 0, %s99
      %s116 = sphi 0, %s100
    $region4: #{pconv2_1.1} parent=1 // loop_header_branch
      %12 = sbr.rel (%p10) target = $region8
    $region5: #{pconv2_1.1} parent=1 // loop_body
      %s14 = ssub.s32 %s9, 1
      %s15 = ssub.s32 %s9, 2
      %s16 = sadd.s32 %s9, 1
      %s17 = ssub.s32 %s9, %s16
      %p18 = scmp.eq.s32.totalorder %s17, 0
      %s20 = sadd.s32 %s19, 1
      %s21 = scalar_select %p18, %s19, %s20
      %p24 = pneg %p18
      %p25 = scmp.eq.s32.totalorder %s9, 1
      %p26 = por %p24, %p25
      %p27 = scmp.ne.s32.totalorder %s19, %s22
      %p28 = scmp.eq.s32.totalorder %s9, 0
      %p29 = por %p27, %p28
      %p30 = scmp.ne.s32.totalorder %s19, %s22
      %p31 = scmp.eq.s32.totalorder %s14, 1
      %p32 = por %p30, %p31
      %p33 = scmp.ne.s32.totalorder %s22, %s23
      %p34 = scmp.eq.s32.totalorder %s14, 0
      %p35 = por %p33, %p34
      %p36 = scmp.ne.s32.totalorder %s22, %s23
      %p37 = scmp.eq.s32.totalorder %s15, 1
      %p38 = por %p36, %p37
      %p40 = scmp.ne.s32.totalorder %s23, %s39
      %p41 = scmp.eq.s32.totalorder %s15, 0
      %p42 = por %p40, %p41
      %s43 = sadd.s32 %s9, 1
      %s44 = smul.u32 %s43, 3
      %s45 = sadd.s32 %s16, 1
      %s46 = smul.u32 %s45, 3
      %s47 = ssub.s32 %s44, %s46
      %p48 = scmp.eq.s32.totalorder %s47, 0
      %s50 = sadd.s32 %s49, 1
      %s51 = scalar_select %p48, %s49, %s50
      %p54 = pneg %p48
      %p55 = scmp.eq.s32.totalorder %s9, 1
      %p56 = por %p54, %p55
      %p57 = scmp.ne.s32.totalorder %s49, %s52
      %p58 = scmp.eq.s32.totalorder %s9, 0
      %p59 = por %p57, %p58
      %p60 = scmp.ne.s32.totalorder %s49, %s52
      %p61 = scmp.eq.s32.totalorder %s14, 1
      %p62 = por %p60, %p61
      %p63 = scmp.ne.s32.totalorder %s52, %s53
      %p64 = scmp.eq.s32.totalorder %s14, 0
      %p65 = por %p63, %p64
      %p66 = scmp.ne.s32.totalorder %s52, %s53
      %p67 = scmp.eq.s32.totalorder %s15, 1
      %p68 = por %p66, %p67
      %p70 = scmp.ne.s32.totalorder %s53, %s69
      %p71 = scmp.eq.s32.totalorder %s15, 0
      %p72 = por %p70, %p71
      %s74 = sadd.s32 %s73, 1
      %p77 = scmp.eq.s32.totalorder %s9, 1
      %p78 = scmp.ne.s32.totalorder %s73, %s75
      %p79 = scmp.eq.s32.totalorder %s9, 0
      %p80 = por %p78, %p79
      %p81 = scmp.ne.s32.totalorder %s73, %s75
      %p82 = scmp.eq.s32.totalorder %s14, 1
      %p83 = por %p81, %p82
      %p84 = scmp.ne.s32.totalorder %s75, %s76
      %p85 = scmp.eq.s32.totalorder %s14, 0
      %p86 = por %p84, %p85
      %p87 = scmp.ne.s32.totalorder %s75, %s76
      %p88 = scmp.eq.s32.totalorder %s15, 1
      %p89 = por %p87, %p88
      %p91 = scmp.ne.s32.totalorder %s76, %s90
      %p92 = scmp.eq.s32.totalorder %s15, 0
      %p93 = por %p91, %p92
      %s94 = ssub.s32 %s9, %s16
      %p95 = scmp.eq.s32.totalorder %s94, 0
      %s97 = sadd.s32 %s96, 1
      %s98 = scalar_select %p95, %s96, %s97
      %p101 = pneg %p95
      %p102 = scmp.eq.s32.totalorder %s9, 1
      %p103 = por %p101, %p102
      %p104 = scmp.ne.s32.totalorder %s96, %s99
      %p105 = scmp.eq.s32.totalorder %s9, 0
      %p106 = por %p104, %p105
      %p107 = scmp.ne.s32.totalorder %s96, %s99
      %p108 = scmp.eq.s32.totalorder %s14, 1
      %p109 = por %p107, %p108
      %p110 = scmp.ne.s32.totalorder %s99, %s100
      %p111 = scmp.eq.s32.totalorder %s14, 0
      %p112 = por %p110, %p111
      %p113 = scmp.ne.s32.totalorder %s99, %s100
      %p114 = scmp.eq.s32.totalorder %s15, 1
      %p115 = por %p113, %p114
      %p117 = scmp.ne.s32.totalorder %s100, %s116
      %p118 = scmp.eq.s32.totalorder %s15, 0
      %p119 = por %p117, %p118
      %p120 = scmp.le.s32.totalorder 1, %s9
      %p121 = scmp.lt.s32.totalorder %s9, 3
      %p122 = pnand %p120, %p121
      %p123 = pneg %p122
      // Predicated region
      $region9: #{pconv2_1.1} parent=5 // pred_check
        _
      $region10: #{pconv2_1.1} parent=5 // pred_check_branch
        %125 = sbr.rel (%p122) target = $region12
      $region11: #{pconv2_1.1} parent=5 // pred_region
        %s126 = ssub.s32 %s9, 1
        // Predicated region
        $region13: #{pconv2_1.1} parent=11 // pred_check
          %p127 = pneg %p86
        $region14: #{pconv2_1.1} parent=11 // pred_check_branch
          %129 = sbr.rel (%p127) target = $region16
        $region15: #{pconv2_1.1} parent=11 // pred_region
          _
        $region16: #{pconv2_1.1} parent=11 // pred_fallthru
          _
      $region12: #{pconv2_1.1} parent=5 // pred_fallthru
        _
      %p130 = scmp.lt.s32.totalorder %s9, 2
      // Predicated region
      $region17: #{pconv2_1.1} parent=5 // pred_check
        %p131 = pneg %p130
      $region18: #{pconv2_1.1} parent=5 // pred_check_branch
        %133 = sbr.rel (%p131) target = $region20
      $region19: #{pconv2_1.1} parent=5 // pred_region
        // Predicated region
        $region21: #{pconv2_1.1} parent=19 // pred_check
          %p134 = pneg %p29
        $region22: #{pconv2_1.1} parent=19 // pred_check_branch
          %136 = sbr.rel (%p134) target = $region24
        $region23: #{pconv2_1.1} parent=19 // pred_region
          %s137 = sand.u32 %s19, 1
          %s138 = sand.u32 %s19, 1
          %s139 = smul.addr %s138, 24
          %s140 = scalar_lea.vmem [#allocation4], %s139
          %s141 = smul.u32 3, %s9
          %s142 = ssub.s32 7, %s141
          %p143 = scmp.lt.s32.totalorder %s142, 3
          %s144 = scalar_select %p143, %s142, 3
          %s145 = smul.u32 128, %s144
          %p146 = scmp.ne.s32.totalorder 0, %s145
          %s147 = smul.addr %s141, 4
          %s148 = scalar_lea.vmem %s0, %s147
          %s149 = smul.u32 %s144, 4
          // Predicated region
          $region25: #{pconv2_1.1} parent=23 // pred_check
            %p150 = pneg %p146
          $region26: #{pconv2_1.1} parent=23 // pred_check_branch
            %152 = sbr.rel (%p150) target = $region28
          $region27: #{pconv2_1.1} parent=23 // pred_region
            %p153 = scmp.lt.u32.totalorder %s149, 8
            %p154 = pneg %p153
            // Predicated region
            $region29: #{pconv2_1.1} parent=27 // pred_check
              _
            $region30: #{pconv2_1.1} parent=27 // pred_check_branch
              %156 = sbr.rel (%p153) target = $region32
            $region31: #{pconv2_1.1} parent=27 // pred_region
              %s173 = sand.u32 %s149, 7
              %p174 = scmp.eq.s32.totalorder %s173, 0
              // Predicated region
              $region44: #{pconv2_1.1} parent=31 // pred_check
                %p175 = pneg %p174
              $region45: #{pconv2_1.1} parent=31 // pred_check_branch
                %177 = sbr.rel (%p175) target = $region47
              $region46: #{pconv2_1.1} parent=31 // pred_region
                %s178 = sshrl.u32 %s149, 3
                %s179 = sshrl.u32 %s178, 5
                // While loop
                $region48: #{pconv2_1.1} parent=46 // loop_pre_header
                  _
                $region49: #{pconv2_1.1} parent=46 // loop_header
                  %s183 = sphi 0, %s185
                  %p184 = scmp.ge.s32.totalorder %s183, %s179
                  %s188 = sphi 0, %s321
                  %s189 = sphi %s148, %s324
                  %s190 = sphi %s140, %s325
                $region50: #{pconv2_1.1} parent=46 // loop_header_branch
                  %187 = sbr.rel (%p184) target = $region54
                $region51: #{pconv2_1.1} parent=46 // loop_body
                  %v191 = vld [vmem:[%s189] sm:$0xff]
                  %192 = vst [vmem:[%s190] sm:$0xff] %v191
                  %v193 = vld [vmem:[%s189 + $0x8] sm:$0xff]
                  %194 = vst [vmem:[%s190 + $0x8] sm:$0xff] %v193
                  %v195 = vld [vmem:[%s189 + $0x10] sm:$0xff]
                  %196 = vst [vmem:[%s190 + $0x10] sm:$0xff] %v195
                  %v197 = vld [vmem:[%s189 + $0x18] sm:$0xff]
                  %198 = vst [vmem:[%s190 + $0x18] sm:$0xff] %v197
                  %v199 = vld [vmem:[%s189 + $0x20] sm:$0xff]
                  %200 = vst [vmem:[%s190 + $0x20] sm:$0xff] %v199
                  %v201 = vld [vmem:[%s189 + $0x28] sm:$0xff]
                  %202 = vst [vmem:[%s190 + $0x28] sm:$0xff] %v201
                  %v203 = vld [vmem:[%s189 + $0x30] sm:$0xff]
                  %204 = vst [vmem:[%s190 + $0x30] sm:$0xff] %v203
                  %v205 = vld [vmem:[%s189 + $0x38] sm:$0xff]
                  %206 = vst [vmem:[%s190 + $0x38] sm:$0xff] %v205
                  %v207 = vld [vmem:[%s189 + $0x40] sm:$0xff]
                  %208 = vst [vmem:[%s190 + $0x40] sm:$0xff] %v207
                  %v209 = vld [vmem:[%s189 + $0x48] sm:$0xff]
                  %210 = vst [vmem:[%s190 + $0x48] sm:$0xff] %v209
                  %v211 = vld [vmem:[%s189 + $0x50] sm:$0xff]
                  %212 = vst [vmem:[%s190 + $0x50] sm:$0xff] %v211
                  %v213 = vld [vmem:[%s189 + $0x58] sm:$0xff]
                  %214 = vst [vmem:[%s190 + $0x58] sm:$0xff] %v213
                  %v215 = vld [vmem:[%s189 + $0x60] sm:$0xff]
                  %216 = vst [vmem:[%s190 + $0x60] sm:$0xff] %v215
                  %v217 = vld [vmem:[%s189 + $0x68] sm:$0xff]
                  %218 = vst [vmem:[%s190 + $0x68] sm:$0xff] %v217
                  %v219 = vld [vmem:[%s189 + $0x70] sm:$0xff]
                  %220 = vst [vmem:[%s190 + $0x70] sm:$0xff] %v219
                  %v221 = vld [vmem:[%s189 + $0x78] sm:$0xff]
                  %222 = vst [vmem:[%s190 + $0x78] sm:$0xff] %v221
                  %v223 = vld [vmem:[%s189 + $0x80] sm:$0xff]
                  %224 = vst [vmem:[%s190 + $0x80] sm:$0xff] %v223
                  %v225 = vld [vmem:[%s189 + $0x88] sm:$0xff]
                  %226 = vst [vmem:[%s190 + $0x88] sm:$0xff] %v225
                  %v227 = vld [vmem:[%s189 + $0x90] sm:$0xff]
                  %228 = vst [vmem:[%s190 + $0x90] sm:$0xff] %v227
                  %v229 = vld [vmem:[%s189 + $0x98] sm:$0xff]
                  %230 = vst [vmem:[%s190 + $0x98] sm:$0xff] %v229
                  %v231 = vld [vmem:[%s189 + $0xa0] sm:$0xff]
                  %232 = vst [vmem:[%s190 + $0xa0] sm:$0xff] %v231
                  %v233 = vld [vmem:[%s189 + $0xa8] sm:$0xff]
                  %234 = vst [vmem:[%s190 + $0xa8] sm:$0xff] %v233
                  %v235 = vld [vmem:[%s189 + $0xb0] sm:$0xff]
                  %236 = vst [vmem:[%s190 + $0xb0] sm:$0xff] %v235
                  %v237 = vld [vmem:[%s189 + $0xb8] sm:$0xff]
                  %238 = vst [vmem:[%s190 + $0xb8] sm:$0xff] %v237
                  %v239 = vld [vmem:[%s189 + $0xc0] sm:$0xff]
                  %240 = vst [vmem:[%s190 + $0xc0] sm:$0xff] %v239
                  %v241 = vld [vmem:[%s189 + $0xc8] sm:$0xff]
                  %242 = vst [vmem:[%s190 + $0xc8] sm:$0xff] %v241
                  %v243 = vld [vmem:[%s189 + $0xd0] sm:$0xff]
                  %244 = vst [vmem:[%s190 + $0xd0] sm:$0xff] %v243
                  %v245 = vld [vmem:[%s189 + $0xd8] sm:$0xff]
                  %246 = vst [vmem:[%s190 + $0xd8] sm:$0xff] %v245
                  %v247 = vld [vmem:[%s189 + $0xe0] sm:$0xff]
                  %248 = vst [vmem:[%s190 + $0xe0] sm:$0xff] %v247
                  %v249 = vld [vmem:[%s189 + $0xe8] sm:$0xff]
                  %250 = vst [vmem:[%s190 + $0xe8] sm:$0xff] %v249
                  %v251 = vld [vmem:[%s189 + $0xf0] sm:$0xff]
                  %252 = vst [vmem:[%s190 + $0xf0] sm:$0xff] %v251
                  %v253 = vld [vmem:[%s189 + $0xf8] sm:$0xff]
                  %254 = vst [vmem:[%s190 + $0xf8] sm:$0xff] %v253
                  %v255 = vld [vmem:[%s189 + $0x1c] sm:$0xff]
                  %256 = vst [vmem:[%s190 + $0xc] sm:$0xff] %v255
                  %v257 = vld [vmem:[%s189 + $0x24] sm:$0xff]
                  %258 = vst [vmem:[%s190 + $0x14] sm:$0xff] %v257
                  %v259 = vld [vmem:[%s189 + $0x2c] sm:$0xff]
                  %260 = vst [vmem:[%s190 + $0x1c] sm:$0xff] %v259
                  %v261 = vld [vmem:[%s189 + $0x34] sm:$0xff]
                  %262 = vst [vmem:[%s190 + $0x24] sm:$0xff] %v261
                  %v263 = vld [vmem:[%s189 + $0x3c] sm:$0xff]
                  %264 = vst [vmem:[%s190 + $0x2c] sm:$0xff] %v263
                  %v265 = vld [vmem:[%s189 + $0x44] sm:$0xff]
                  %266 = vst [vmem:[%s190 + $0x34] sm:$0xff] %v265
                  %v267 = vld [vmem:[%s189 + $0x4c] sm:$0xff]
                  %268 = vst [vmem:[%s190 + $0x3c] sm:$0xff] %v267
                  %v269 = vld [vmem:[%s189 + $0x54] sm:$0xff]
                  %270 = vst [vmem:[%s190 + $0x44] sm:$0xff] %v269
                  %v271 = vld [vmem:[%s189 + $0x5c] sm:$0xff]
                  %272 = vst [vmem:[%s190 + $0x4c] sm:$0xff] %v271
                  %v273 = vld [vmem:[%s189 + $0x64] sm:$0xff]
                  %274 = vst [vmem:[%s190 + $0x54] sm:$0xff] %v273
                  %v275 = vld [vmem:[%s189 + $0x6c] sm:$0xff]
                  %276 = vst [vmem:[%s190 + $0x5c] sm:$0xff] %v275
                  %v277 = vld [vmem:[%s189 + $0x74] sm:$0xff]
                  %278 = vst [vmem:[%s190 + $0x64] sm:$0xff] %v277
                  %v279 = vld [vmem:[%s189 + $0x7c] sm:$0xff]
                  %280 = vst [vmem:[%s190 + $0x6c] sm:$0xff] %v279
                  %v281 = vld [vmem:[%s189 + $0x84] sm:$0xff]
                  %282 = vst [vmem:[%s190 + $0x74] sm:$0xff] %v281
                  %v283 = vld [vmem:[%s189 + $0x8c] sm:$0xff]
                  %284 = vst [vmem:[%s190 + $0x7c] sm:$0xff] %v283
                  %v285 = vld [vmem:[%s189 + $0x94] sm:$0xff]
                  %286 = vst [vmem:[%s190 + $0x84] sm:$0xff] %v285
                  %v287 = vld [vmem:[%s189 + $0x9c] sm:$0xff]
                  %288 = vst [vmem:[%s190 + $0x8c] sm:$0xff] %v287
                  %v289 = vld [vmem:[%s189 + $0xa4] sm:$0xff]
                  %290 = vst [vmem:[%s190 + $0x94] sm:$0xff] %v289
                  %v291 = vld [vmem:[%s189 + $0xac] sm:$0xff]
                  %292 = vst [vmem:[%s190 + $0x9c] sm:$0xff] %v291
                  %v293 = vld [vmem:[%s189 + $0xb4] sm:$0xff]
                  %294 = vst [vmem:[%s190 + $0xa4] sm:$0xff] %v293
                  %v295 = vld [vmem:[%s189 + $0xbc] sm:$0xff]
                  %296 = vst [vmem:[%s190 + $0xac] sm:$0xff] %v295
                  %v297 = vld [vmem:[%s189 + $0xc4] sm:$0xff]
                  %298 = vst [vmem:[%s190 + $0xb4] sm:$0xff] %v297
                  %v299 = vld [vmem:[%s189 + $0xcc] sm:$0xff]
                  %300 = vst [vmem:[%s190 + $0xbc] sm:$0xff] %v299
                  %v301 = vld [vmem:[%s189 + $0xd4] sm:$0xff]
                  %302 = vst [vmem:[%s190 + $0xc4] sm:$0xff] %v301
                  %v303 = vld [vmem:[%s189 + $0xdc] sm:$0xff]
                  %304 = vst [vmem:[%s190 + $0xcc] sm:$0xff] %v303
                  %v305 = vld [vmem:[%s189 + $0xe4] sm:$0xff]
                  %306 = vst [vmem:[%s190 + $0xd4] sm:$0xff] %v305
                  %v307 = vld [vmem:[%s189 + $0xec] sm:$0xff]
                  %308 = vst [vmem:[%s190 + $0xdc] sm:$0xff] %v307
                  %v309 = vld [vmem:[%s189 + $0xf4] sm:$0xff]
                  %310 = vst [vmem:[%s190 + $0xe4] sm:$0xff] %v309
                  %v311 = vld [vmem:[%s189 + $0xfc] sm:$0xff]
                  %312 = vst [vmem:[%s190 + $0xec] sm:$0xff] %v311
                  %v313 = vld [vmem:[%s189 + $0x104] sm:$0xff]
                  %314 = vst [vmem:[%s190 + $0xf4] sm:$0xff] %v313
                  %v315 = vld [vmem:[%s189 + $0x10c] sm:$0xff]
                  %316 = vst [vmem:[%s190 + $0xfc] sm:$0xff] %v315
                  %v317 = vld [vmem:[%s189 + $0x114] sm:$0xff]
                  %318 = vst [vmem:[%s190 + $0x104] sm:$0xff] %v317
                  %s319 = sadd.s32 1, %s188
                  %p320 = scmp.ge.s32.totalorder %s319, %s179
                  %s321 = scalar_select %p320, 0, %s319
                  %s322 = smul.u32 %s321, 256
                  %s323 = smul.u32 %s321, 256
                  %s324 = scalar_lea.vmem %s148, %s322
                  %s325 = scalar_lea.vmem %s140, %s323 [#allocation4]
                $region52: #{pconv2_1.1} parent=46 // loop_footer
                  %s185 = sadd.s32 %s183, 1
                $region53: #{pconv2_1.1} parent=46 // loop_footer_branch
                  %182 = sbr.rel target = $region49
                $region54: #{pconv2_1.1} parent=46 // loop_exit
                  _
                %s326 = sshrl.u32 %s178, 5
                %s327 = sand.u32 %s178, 31
                %s328 = smul.u32 %s326, 32
                %s329 = smul.u32 128, %s328
                %s330 = sshra.s32 %s329, 4
                %s331 = scalar_lea.vmem %s148, %s330
                %s332 = smul.u32 128, %s328
                %s333 = sshra.s32 %s332, 4
                %s334 = scalar_lea.vmem %s140, %s333 [#allocation4]
                // While loop
                $region55: #{pconv2_1.1} parent=46 // loop_pre_header
                  _
                $region56: #{pconv2_1.1} parent=46 // loop_header
                  %s338 = sphi 0, %s340
                  %p339 = scmp.ge.s32.totalorder %s338, %s327
                  %s343 = sphi 0, %s352
                  %s344 = sphi %s331, %s355
                  %s345 = sphi %s334, %s356
                $region57: #{pconv2_1.1} parent=46 // loop_header_branch
                  %342 = sbr.rel (%p339) target = $region61
                $region58: #{pconv2_1.1} parent=46 // loop_body
                  %v346 = vld [vmem:[%s344] sm:$0xff]
                  %347 = vst [vmem:[%s345] sm:$0xff] %v346
                  %v348 = vld [vmem:[%s344 + $0x1c] sm:$0xff]
                  %349 = vst [vmem:[%s345 + $0xc] sm:$0xff] %v348
                  %s350 = sadd.s32 1, %s343
                  %p351 = scmp.ge.s32.totalorder %s350, %s327
                  %s352 = scalar_select %p351, 0, %s350
                  %s353 = smul.u32 %s352, 8
                  %s354 = smul.u32 %s352, 8
                  %s355 = scalar_lea.vmem %s331, %s353
                  %s356 = scalar_lea.vmem %s334, %s354 [#allocation4]
                $region59: #{pconv2_1.1} parent=46 // loop_footer
                  %s340 = sadd.s32 %s338, 1
                $region60: #{pconv2_1.1} parent=46 // loop_footer_branch
                  %337 = sbr.rel target = $region56
                $region61: #{pconv2_1.1} parent=46 // loop_exit
                  _
              $region47: #{pconv2_1.1} parent=31 // pred_fallthru
                _
              %p357 = pneg %p174
              // Predicated region
              $region62: #{pconv2_1.1} parent=31 // pred_check
                _
              $region63: #{pconv2_1.1} parent=31 // pred_check_branch
                %359 = sbr.rel (%p174) target = $region65
              $region64: #{pconv2_1.1} parent=31 // pred_region
                %s360 = sand.u32 %s149, 7
                %s361 = ssub.s32 %s149, %s360
                %s362 = scalar_lea.vmem %s148, %s361
                %s363 = ssub.s32 %s149, %s360
                %s364 = scalar_lea.vmem %s140, %s363 [#allocation4]
                %s365 = sshrl.u32 %s149, 3
                %s366 = sshrl.u32 %s365, 5
                // While loop
                $region66: #{pconv2_1.1} parent=64 // loop_pre_header
                  _
                $region67: #{pconv2_1.1} parent=64 // loop_header
                  %s370 = sphi 0, %s372
                  %p371 = scmp.ge.s32.totalorder %s370, %s366
                  %s375 = sphi 0, %s508
                  %s376 = sphi %s148, %s511
                  %s377 = sphi %s140, %s512
                $region68: #{pconv2_1.1} parent=64 // loop_header_branch
                  %374 = sbr.rel (%p371) target = $region72
                $region69: #{pconv2_1.1} parent=64 // loop_body
                  %v378 = vld [vmem:[%s376] sm:$0xff]
                  %379 = vst [vmem:[%s377] sm:$0xff] %v378
                  %v380 = vld [vmem:[%s376 + $0x8] sm:$0xff]
                  %381 = vst [vmem:[%s377 + $0x8] sm:$0xff] %v380
                  %v382 = vld [vmem:[%s376 + $0x10] sm:$0xff]
                  %383 = vst [vmem:[%s377 + $0x10] sm:$0xff] %v382
                  %v384 = vld [vmem:[%s376 + $0x18] sm:$0xff]
                  %385 = vst [vmem:[%s377 + $0x18] sm:$0xff] %v384
                  %v386 = vld [vmem:[%s376 + $0x20] sm:$0xff]
                  %387 = vst [vmem:[%s377 + $0x20] sm:$0xff] %v386
                  %v388 = vld [vmem:[%s376 + $0x28] sm:$0xff]
                  %389 = vst [vmem:[%s377 + $0x28] sm:$0xff] %v388
                  %v390 = vld [vmem:[%s376 + $0x30] sm:$0xff]
                  %391 = vst [vmem:[%s377 + $0x30] sm:$0xff] %v390
                  %v392 = vld [vmem:[%s376 + $0x38] sm:$0xff]
                  %393 = vst [vmem:[%s377 + $0x38] sm:$0xff] %v392
                  %v394 = vld [vmem:[%s376 + $0x40] sm:$0xff]
                  %395 = vst [vmem:[%s377 + $0x40] sm:$0xff] %v394
                  %v396 = vld [vmem:[%s376 + $0x48] sm:$0xff]
                  %397 = vst [vmem:[%s377 + $0x48] sm:$0xff] %v396
                  %v398 = vld [vmem:[%s376 + $0x50] sm:$0xff]
                  %399 = vst [vmem:[%s377 + $0x50] sm:$0xff] %v398
                  %v400 = vld [vmem:[%s376 + $0x58] sm:$0xff]
                  %401 = vst [vmem:[%s377 + $0x58] sm:$0xff] %v400
                  %v402 = vld [vmem:[%s376 + $0x60] sm:$0xff]
                  %403 = vst [vmem:[%s377 + $0x60] sm:$0xff] %v402
                  %v404 = vld [vmem:[%s376 + $0x68] sm:$0xff]
                  %405 = vst [vmem:[%s377 + $0x68] sm:$0xff] %v404
                  %v406 = vld [vmem:[%s376 + $0x70] sm:$0xff]
                  %407 = vst [vmem:[%s377 + $0x70] sm:$0xff] %v406
                  %v408 = vld [vmem:[%s376 + $0x78] sm:$0xff]
                  %409 = vst [vmem:[%s377 + $0x78] sm:$0xff] %v408
                  %v410 = vld [vmem:[%s376 + $0x80] sm:$0xff]
                  %411 = vst [vmem:[%s377 + $0x80] sm:$0xff] %v410
                  %v412 = vld [vmem:[%s376 + $0x88] sm:$0xff]
                  %413 = vst [vmem:[%s377 + $0x88] sm:$0xff] %v412
                  %v414 = vld [vmem:[%s376 + $0x90] sm:$0xff]
                  %415 = vst [vmem:[%s377 + $0x90] sm:$0xff] %v414
                  %v416 = vld [vmem:[%s376 + $0x98] sm:$0xff]
                  %417 = vst [vmem:[%s377 + $0x98] sm:$0xff] %v416
                  %v418 = vld [vmem:[%s376 + $0xa0] sm:$0xff]
                  %419 = vst [vmem:[%s377 + $0xa0] sm:$0xff] %v418
                  %v420 = vld [vmem:[%s376 + $0xa8] sm:$0xff]
                  %421 = vst [vmem:[%s377 + $0xa8] sm:$0xff] %v420
                  %v422 = vld [vmem:[%s376 + $0xb0] sm:$0xff]
                  %423 = vst [vmem:[%s377 + $0xb0] sm:$0xff] %v422
                  %v424 = vld [vmem:[%s376 + $0xb8] sm:$0xff]
                  %425 = vst [vmem:[%s377 + $0xb8] sm:$0xff] %v424
                  %v426 = vld [vmem:[%s376 + $0xc0] sm:$0xff]
                  %427 = vst [vmem:[%s377 + $0xc0] sm:$0xff] %v426
                  %v428 = vld [vmem:[%s376 + $0xc8] sm:$0xff]
                  %429 = vst [vmem:[%s377 + $0xc8] sm:$0xff] %v428
                  %v430 = vld [vmem:[%s376 + $0xd0] sm:$0xff]
                  %431 = vst [vmem:[%s377 + $0xd0] sm:$0xff] %v430
                  %v432 = vld [vmem:[%s376 + $0xd8] sm:$0xff]
                  %433 = vst [vmem:[%s377 + $0xd8] sm:$0xff] %v432
                  %v434 = vld [vmem:[%s376 + $0xe0] sm:$0xff]
                  %435 = vst [vmem:[%s377 + $0xe0] sm:$0xff] %v434
                  %v436 = vld [vmem:[%s376 + $0xe8] sm:$0xff]
                  %437 = vst [vmem:[%s377 + $0xe8] sm:$0xff] %v436
                  %v438 = vld [vmem:[%s376 + $0xf0] sm:$0xff]
                  %439 = vst [vmem:[%s377 + $0xf0] sm:$0xff] %v438
                  %v440 = vld [vmem:[%s376 + $0xf8] sm:$0xff]
                  %441 = vst [vmem:[%s377 + $0xf8] sm:$0xff] %v440
                  %v442 = vld [vmem:[%s376 + $0x1c] sm:$0xff]
                  %443 = vst [vmem:[%s377 + $0xc] sm:$0xff] %v442
                  %v444 = vld [vmem:[%s376 + $0x24] sm:$0xff]
                  %445 = vst [vmem:[%s377 + $0x14] sm:$0xff] %v444
                  %v446 = vld [vmem:[%s376 + $0x2c] sm:$0xff]
                  %447 = vst [vmem:[%s377 + $0x1c] sm:$0xff] %v446
                  %v448 = vld [vmem:[%s376 + $0x34] sm:$0xff]
                  %449 = vst [vmem:[%s377 + $0x24] sm:$0xff] %v448
                  %v450 = vld [vmem:[%s376 + $0x3c] sm:$0xff]
                  %451 = vst [vmem:[%s377 + $0x2c] sm:$0xff] %v450
                  %v452 = vld [vmem:[%s376 + $0x44] sm:$0xff]
                  %453 = vst [vmem:[%s377 + $0x34] sm:$0xff] %v452
                  %v454 = vld [vmem:[%s376 + $0x4c] sm:$0xff]
                  %455 = vst [vmem:[%s377 + $0x3c] sm:$0xff] %v454
                  %v456 = vld [vmem:[%s376 + $0x54] sm:$0xff]
                  %457 = vst [vmem:[%s377 + $0x44] sm:$0xff] %v456
                  %v458 = vld [vmem:[%s376 + $0x5c] sm:$0xff]
                  %459 = vst [vmem:[%s377 + $0x4c] sm:$0xff] %v458
                  %v460 = vld [vmem:[%s376 + $0x64] sm:$0xff]
                  %461 = vst [vmem:[%s377 + $0x54] sm:$0xff] %v460
                  %v462 = vld [vmem:[%s376 + $0x6c] sm:$0xff]
                  %463 = vst [vmem:[%s377 + $0x5c] sm:$0xff] %v462
                  %v464 = vld [vmem:[%s376 + $0x74] sm:$0xff]
                  %465 = vst [vmem:[%s377 + $0x64] sm:$0xff] %v464
                  %v466 = vld [vmem:[%s376 + $0x7c] sm:$0xff]
                  %467 = vst [vmem:[%s377 + $0x6c] sm:$0xff] %v466
                  %v468 = vld [vmem:[%s376 + $0x84] sm:$0xff]
                  %469 = vst [vmem:[%s377 + $0x74] sm:$0xff] %v468
                  %v470 = vld [vmem:[%s376 + $0x8c] sm:$0xff]
                  %471 = vst [vmem:[%s377 + $0x7c] sm:$0xff] %v470
                  %v472 = vld [vmem:[%s376 + $0x94] sm:$0xff]
                  %473 = vst [vmem:[%s377 + $0x84] sm:$0xff] %v472
                  %v474 = vld [vmem:[%s376 + $0x9c] sm:$0xff]
                  %475 = vst [vmem:[%s377 + $0x8c] sm:$0xff] %v474
                  %v476 = vld [vmem:[%s376 + $0xa4] sm:$0xff]
                  %477 = vst [vmem:[%s377 + $0x94] sm:$0xff] %v476
                  %v478 = vld [vmem:[%s376 + $0xac] sm:$0xff]
                  %479 = vst [vmem:[%s377 + $0x9c] sm:$0xff] %v478
                  %v480 = vld [vmem:[%s376 + $0xb4] sm:$0xff]
                  %481 = vst [vmem:[%s377 + $0xa4] sm:$0xff] %v480
                  %v482 = vld [vmem:[%s376 + $0xbc] sm:$0xff]
                  %483 = vst [vmem:[%s377 + $0xac] sm:$0xff] %v482
                  %v484 = vld [vmem:[%s376 + $0xc4] sm:$0xff]
                  %485 = vst [vmem:[%s377 + $0xb4] sm:$0xff] %v484
                  %v486 = vld [vmem:[%s376 + $0xcc] sm:$0xff]
                  %487 = vst [vmem:[%s377 + $0xbc] sm:$0xff] %v486
                  %v488 = vld [vmem:[%s376 + $0xd4] sm:$0xff]
                  %489 = vst [vmem:[%s377 + $0xc4] sm:$0xff] %v488
                  %v490 = vld [vmem:[%s376 + $0xdc] sm:$0xff]
                  %491 = vst [vmem:[%s377 + $0xcc] sm:$0xff] %v490
                  %v492 = vld [vmem:[%s376 + $0xe4] sm:$0xff]
                  %493 = vst [vmem:[%s377 + $0xd4] sm:$0xff] %v492
                  %v494 = vld [vmem:[%s376 + $0xec] sm:$0xff]
                  %495 = vst [vmem:[%s377 + $0xdc] sm:$0xff] %v494
                  %v496 = vld [vmem:[%s376 + $0xf4] sm:$0xff]
                  %497 = vst [vmem:[%s377 + $0xe4] sm:$0xff] %v496
                  %v498 = vld [vmem:[%s376 + $0xfc] sm:$0xff]
                  %499 = vst [vmem:[%s377 + $0xec] sm:$0xff] %v498
                  %v500 = vld [vmem:[%s376 + $0x104] sm:$0xff]
                  %501 = vst [vmem:[%s377 + $0xf4] sm:$0xff] %v500
                  %v502 = vld [vmem:[%s376 + $0x10c] sm:$0xff]
                  %503 = vst [vmem:[%s377 + $0xfc] sm:$0xff] %v502
                  %v504 = vld [vmem:[%s376 + $0x114] sm:$0xff]
                  %505 = vst [vmem:[%s377 + $0x104] sm:$0xff] %v504
                  %s506 = sadd.s32 1, %s375
                  %p507 = scmp.ge.s32.totalorder %s506, %s366
                  %s508 = scalar_select %p507, 0, %s506
                  %s509 = smul.u32 %s508, 256
                  %s510 = smul.u32 %s508, 256
                  %s511 = scalar_lea.vmem %s148, %s509
                  %s512 = scalar_lea.vmem %s140, %s510 [#allocation4]
                $region70: #{pconv2_1.1} parent=64 // loop_footer
                  %s372 = sadd.s32 %s370, 1
                $region71: #{pconv2_1.1} parent=64 // loop_footer_branch
                  %369 = sbr.rel target = $region67
                $region72: #{pconv2_1.1} parent=64 // loop_exit
                  _
                %s513 = sshrl.u32 %s365, 5
                %s514 = sand.u32 %s365, 31
                %s515 = smul.u32 %s513, 32
                %s516 = smul.u32 128, %s515
                %s517 = sshra.s32 %s516, 4
                %s518 = scalar_lea.vmem %s148, %s517
                %s519 = smul.u32 128, %s515
                %s520 = sshra.s32 %s519, 4
                %s521 = scalar_lea.vmem %s140, %s520 [#allocation4]
                // While loop
                $region73: #{pconv2_1.1} parent=64 // loop_pre_header
                  _
                $region74: #{pconv2_1.1} parent=64 // loop_header
                  %s525 = sphi 0, %s527
                  %p526 = scmp.ge.s32.totalorder %s525, %s514
                  %s530 = sphi 0, %s539
                  %s531 = sphi %s518, %s542
                  %s532 = sphi %s521, %s543
                $region75: #{pconv2_1.1} parent=64 // loop_header_branch
                  %529 = sbr.rel (%p526) target = $region79
                $region76: #{pconv2_1.1} parent=64 // loop_body
                  %v533 = vld [vmem:[%s531] sm:$0xff]
                  %534 = vst [vmem:[%s532] sm:$0xff] %v533
                  %v535 = vld [vmem:[%s531 + $0x1c] sm:$0xff]
                  %536 = vst [vmem:[%s532 + $0xc] sm:$0xff] %v535
                  %s537 = sadd.s32 1, %s530
                  %p538 = scmp.ge.s32.totalorder %s537, %s514
                  %s539 = scalar_select %p538, 0, %s537
                  %s540 = smul.u32 %s539, 8
                  %s541 = smul.u32 %s539, 8
                  %s542 = scalar_lea.vmem %s518, %s540
                  %s543 = scalar_lea.vmem %s521, %s541 [#allocation4]
                $region77: #{pconv2_1.1} parent=64 // loop_footer
                  %s527 = sadd.s32 %s525, 1
                $region78: #{pconv2_1.1} parent=64 // loop_footer_branch
                  %524 = sbr.rel target = $region74
                $region79: #{pconv2_1.1} parent=64 // loop_exit
                  _
                %s544 = sshllo.u32 0, %s360
                loop: start=0, step=1, limit=1
                $region80: #{pconv2_1.1} parent=64 // loop_pre_header
                  _
                $region81: #{pconv2_1.1} parent=64 // loop_header
                  %s546 = sphi 0, %s550
                  %p547 = scmp.ge.s32.totalorder %s546, 1
                  %s551 = sphi %s362, %s362
                  %s552 = sphi %s364, %s364
                $region82: #{pconv2_1.1} parent=64 // loop_header_branch
                  %549 = sbr.rel (%p547) target = $region86
                $region83: #{pconv2_1.1} parent=64 // loop_body
                  %v553 = vld [vmem:[%s551] sm:%s544]
                  %554 = vst [vmem:[%s552] sm:%s544] %v553
                  %v555 = vld [vmem:[%s551 + $0x1c] sm:%s544]
                  %556 = vst [vmem:[%s552 + $0xc] sm:%s544] %v555
                $region84: #{pconv2_1.1} parent=64 // loop_footer
                  %s550 = sadd.s32 1, %s546
                $region85: #{pconv2_1.1} parent=64 // loop_footer_branch
                  %545 = sbr.rel target = $region81
                $region86: #{pconv2_1.1} parent=64 // loop_exit
                  _
              $region65: #{pconv2_1.1} parent=31 // pred_fallthru
                _
            $region32: #{pconv2_1.1} parent=27 // pred_fallthru
              _
            // Predicated region
            $region33: #{pconv2_1.1} parent=27 // pred_check
              %p157 = pneg %p153
            $region34: #{pconv2_1.1} parent=27 // pred_check_branch
              %159 = sbr.rel (%p157) target = $region36
            $region35: #{pconv2_1.1} parent=27 // pred_region
              %s160 = sshllo.u32 0, %s149
              loop: start=0, step=1, limit=1
              $region37: #{pconv2_1.1} parent=35 // loop_pre_header
                _
              $region38: #{pconv2_1.1} parent=35 // loop_header
                %s162 = sphi 0, %s166
                %p163 = scmp.ge.s32.totalorder %s162, 1
                %s167 = sphi %s148, %s148
                %s168 = sphi %s140, %s140
              $region39: #{pconv2_1.1} parent=35 // loop_header_branch
                %165 = sbr.rel (%p163) target = $region43
              $region40: #{pconv2_1.1} parent=35 // loop_body
                %v169 = vld [vmem:[%s167] sm:%s160]
                %170 = vst [vmem:[%s168] sm:%s160] %v169
                %v171 = vld [vmem:[%s167 + $0x1c] sm:%s160]
                %172 = vst [vmem:[%s168 + $0xc] sm:%s160] %v171
              $region41: #{pconv2_1.1} parent=35 // loop_footer
                %s166 = sadd.s32 1, %s162
              $region42: #{pconv2_1.1} parent=35 // loop_footer_branch
                %161 = sbr.rel target = $region38
              $region43: #{pconv2_1.1} parent=35 // loop_exit
                _
            $region36: #{pconv2_1.1} parent=27 // pred_fallthru
              _
          $region28: #{pconv2_1.1} parent=23 // pred_fallthru
            _
          %557 = vnop
        $region24: #{pconv2_1.1} parent=19 // pred_fallthru
          _
        // Predicated region
        $region87: #{pconv2_1.1} parent=19 // pred_check
          %p558 = pneg %p59
        $region88: #{pconv2_1.1} parent=19 // pred_check_branch
          %560 = sbr.rel (%p558) target = $region90
        $region89: #{pconv2_1.1} parent=19 // pred_region
          %s561 = sand.u32 %s49, 1
          %s562 = sand.u32 %s49, 1
          %s563 = smul.addr %s562, 8
          %s564 = scalar_lea.vmem [#allocation5], %s563
          %s565 = sadd.s32 %s9, 1
          %s566 = smul.u32 %s565, 3
          %s567 = smul.addr %s566, 4
          %s568 = scalar_lea.vmem %s1, %s567
          // Predicated region
          $region91: #{pconv2_1.1} parent=89 // pred_check
            _
          $region92: #{pconv2_1.1} parent=89 // pred_check_branch
            %570 = sbr.rel (0) target = $region94
          $region93: #{pconv2_1.1} parent=89 // pred_region
            // Predicated region
            $region95: #{pconv2_1.1} parent=93 // pred_check
              _
            $region96: #{pconv2_1.1} parent=93 // pred_check_branch
              %572 = sbr.rel target = $region98
            $region97: #{pconv2_1.1} parent=93 // pred_region
              // Predicated region
              $region110: #{pconv2_1.1} parent=97 // pred_check
                _
              $region111: #{pconv2_1.1} parent=97 // pred_check_branch
                %589 = sbr.rel (0) target = $region113
              $region112: #{pconv2_1.1} parent=97 // pred_region
                loop: start=0, step=1, limit=1
                $region114: #{pconv2_1.1} parent=112 // loop_pre_header
                  _
                $region115: #{pconv2_1.1} parent=112 // loop_header
                  %s591 = sphi 0, %s595
                  %p592 = scmp.ge.s32.totalorder %s591, 1
                  %s596 = sphi %s568, %s568
                  %s597 = sphi %s564, %s564
                $region116: #{pconv2_1.1} parent=112 // loop_header_branch
                  %594 = sbr.rel (%p592) target = $region120
                $region117: #{pconv2_1.1} parent=112 // loop_body
                  _
                $region118: #{pconv2_1.1} parent=112 // loop_footer
                  %s595 = sadd.s32 1, %s591
                $region119: #{pconv2_1.1} parent=112 // loop_footer_branch
                  %590 = sbr.rel target = $region115
                $region120: #{pconv2_1.1} parent=112 // loop_exit
                  _
                loop: start=0, step=1, limit=1
                $region121: #{pconv2_1.1} parent=112 // loop_pre_header
                  _
                $region122: #{pconv2_1.1} parent=112 // loop_header
                  %s600 = sphi 0, %s604
                  %p601 = scmp.ge.s32.totalorder %s600, 1
                  %s605 = sphi %s568, %s568
                  %s606 = sphi %s564, %s564
                $region123: #{pconv2_1.1} parent=112 // loop_header_branch
                  %603 = sbr.rel (%p601) target = $region127
                $region124: #{pconv2_1.1} parent=112 // loop_body
                  %v607 = vld [vmem:[%s605] sm:$0xf]
                  %608 = vst [vmem:[%s606] sm:$0xf] %v607
                  %v609 = vld [vmem:[%s605 + $0x1c] sm:$0xf]
                  %610 = vst [vmem:[%s606 + $0x4] sm:$0xf] %v609
                $region125: #{pconv2_1.1} parent=112 // loop_footer
                  %s604 = sadd.s32 1, %s600
                $region126: #{pconv2_1.1} parent=112 // loop_footer_branch
                  %599 = sbr.rel target = $region122
                $region127: #{pconv2_1.1} parent=112 // loop_exit
                  _
              $region113: #{pconv2_1.1} parent=97 // pred_fallthru
                _
            $region98: #{pconv2_1.1} parent=93 // pred_fallthru
              _
            // Predicated region
            $region99: #{pconv2_1.1} parent=93 // pred_check
              _
            $region100: #{pconv2_1.1} parent=93 // pred_check_branch
              %574 = sbr.rel (0) target = $region102
            $region101: #{pconv2_1.1} parent=93 // pred_region
              loop: start=0, step=1, limit=1
              $region103: #{pconv2_1.1} parent=101 // loop_pre_header
                _
              $region104: #{pconv2_1.1} parent=101 // loop_header
                %s577 = sphi 0, %s581
                %p578 = scmp.ge.s32.totalorder %s577, 1
                %s582 = sphi %s568, %s568
                %s583 = sphi %s564, %s564
              $region105: #{pconv2_1.1} parent=101 // loop_header_branch
                %580 = sbr.rel (%p578) target = $region109
              $region106: #{pconv2_1.1} parent=101 // loop_body
                %v584 = vld [vmem:[%s582] sm:$0xf]
                %585 = vst [vmem:[%s583] sm:$0xf] %v584
                %v586 = vld [vmem:[%s582 + $0x1c] sm:$0xf]
                %587 = vst [vmem:[%s583 + $0x4] sm:$0xf] %v586
              $region107: #{pconv2_1.1} parent=101 // loop_footer
                %s581 = sadd.s32 1, %s577
              $region108: #{pconv2_1.1} parent=101 // loop_footer_branch
                %576 = sbr.rel target = $region104
              $region109: #{pconv2_1.1} parent=101 // loop_exit
                _
            $region102: #{pconv2_1.1} parent=93 // pred_fallthru
              _
          $region94: #{pconv2_1.1} parent=89 // pred_fallthru
            _
          %611 = vnop
        $region90: #{pconv2_1.1} parent=19 // pred_fallthru
          _
      $region20: #{pconv2_1.1} parent=5 // pred_fallthru
        _
      %p612 = scmp.le.s32.totalorder 1, %s9
      %p613 = scmp.lt.s32.totalorder %s9, 3
      %p614 = pnand %p612, %p613
      %p615 = pneg %p614
      // Predicated region
      $region128: #{pconv2_1.1} parent=5 // pred_check
        _
      $region129: #{pconv2_1.1} parent=5 // pred_check_branch
        %617 = sbr.rel (%p614) target = $region131
      $region130: #{pconv2_1.1} parent=5 // pred_region
        %s618 = ssub.s32 %s9, 1
        %s619 = sand.u32 %s22, 1
        %s620 = sand.u32 %s22, 1
        %s621 = smul.addr %s620, 24
        %s622 = scalar_lea.vmem [#allocation4], %s621
        // Predicated region
        $region132: #{pconv2_1.1} parent=130 // pred_check
          %p623 = pneg %p35
        $region133: #{pconv2_1.1} parent=130 // pred_check_branch
          %625 = sbr.rel (%p623) target = $region135
        $region134: #{pconv2_1.1} parent=130 // pred_region
          _
        $region135: #{pconv2_1.1} parent=130 // pred_fallthru
          _
        %s626 = sand.u32 %s52, 1
        %s627 = sand.u32 %s52, 1
        %s628 = smul.addr %s627, 8
        %s629 = scalar_lea.vmem [#allocation5], %s628
        // Predicated region
        $region136: #{pconv2_1.1} parent=130 // pred_check
          %p630 = pneg %p65
        $region137: #{pconv2_1.1} parent=130 // pred_check_branch
          %632 = sbr.rel (%p630) target = $region139
        $region138: #{pconv2_1.1} parent=130 // pred_region
          _
        $region139: #{pconv2_1.1} parent=130 // pred_fallthru
          _
        %s633 = sand.u32 %s22, 1
        %s634 = sand.u32 %s22, 1
        %s635 = smul.addr %s634, 24
        %s636 = scalar_lea.vmem [#allocation4], %s635
        %p637 = pneg %p35
        %p638 = pneg %p32
        %s639 = sand.u32 %s52, 1
        %s640 = sand.u32 %s52, 1
        %s641 = smul.addr %s640, 8
        %s642 = scalar_lea.vmem [#allocation5], %s641
        %p643 = pneg %p65
        %p644 = pneg %p62
        %p645 = pneg %p86
        %p646 = pneg %p83
        %p647 = pneg %p112
        %p648 = pneg %p109
        %s649 = sand.u32 %s99, 1
        %s650 = sand.u32 %s99, 1
        %s651 = smul.addr %s650, 48
        %s652 = scalar_lea.vmem [#allocation6], %s651
        %s653 = smul.u32 3, %s14
        %s654 = ssub.s32 7, %s653
        %p655 = scmp.lt.s32.totalorder %s654, 3
        %s656 = scalar_select %p655, %s654, 3
        %s657 = smul.u32 128, %s656
        %s658 = sadd.s32 %s14, 1
        %s659 = smul.u32 %s658, 3
        %s660 = smul.u32 3, %s14
        %v662 = vld [vmem:[%s622] sm:$0xff]
        %v663 = vld [vmem:[%s622 + $0x8] sm:$0xf]
        %v664 = vld [vmem:[%s622 + $0xc] sm:$0xff]
        %v665 = vld [vmem:[%s622 + $0x14] sm:$0xf]
        %v670 = vunpack.c.l.b16 %v662
        %v671 = vunpack.c.h.b16 %v662
        %v672 = vunpack.c.l.b16 %v663
        %v673 = vunpack.c.l.b16 %v664
        %v674 = vunpack.c.h.b16 %v664
        %v675 = vunpack.c.l.b16 %v665
        %v676 = vpack.c.b16 %v673, %v670
        %v677 = vpack.c.b16 %v674, %v671
        %v678 = vpack.c.b16 %v675, %v672
        %682 = vst [vmem:[#allocation2] sm:$0xff] %v676
        %683 = vst [vmem:[#allocation2 + $0x8] sm:$0xff] %v677
        %684 = vst [vmem:[#allocation2 + $0x10] sm:$0xff] %v678
        %v685 = vld [vmem:[%s629] sm:$0xf]
        %v686 = vld [vmem:[%s629 + $0x4] sm:$0xf]
        %v689 = vunpack.c.l.b16 %v685
        %v690 = vunpack.c.l.b16 %v686
        %v691 = vpack.c.b16 %v690, %v689
        %693 = vst [vmem:[#allocation2 + $0x18] sm:$0xff] %v691
        %v694 = vld [vmem:[#allocation2] sm:$0xff]
        %v695 = vld [vmem:[#allocation2 + $0x8] sm:$0xff]
        %v696 = vld [vmem:[#allocation2 + $0x10] sm:$0xff]
        %697 = vst [vmem:[#allocation3] sm:$0xff] %v694
        %698 = vst [vmem:[#allocation3 + $0x8] sm:$0xff] %v695
        %699 = vst [vmem:[#allocation3 + $0x10] sm:$0xff] %v696
        %v700 = vld [vmem:[#allocation2] sm:$0xff]
        %v701 = vld [vmem:[#allocation2 + $0x8] sm:$0xff]
        %v702 = vld [vmem:[#allocation2 + $0x10] sm:$0xff]
        %v703 = vld [vmem:[#allocation2 + $0x18] sm:$0xff]
        %708 = vrot.lane.b32.xlu0 %v700, 127
        %v709 = vpop.permute.xlu0 %708
        %710 = vrot.lane.b32.xlu0 %v701, 127
        %v711 = vpop.permute.xlu0 %710
        %712 = vrot.lane.b32.xlu0 %v702, 127
        %v713 = vpop.permute.xlu0 %712
        %714 = vrot.lane.b32.xlu0 %v703, 127
        %v715 = vpop.permute.xlu0 %714
        %vm716 = vcmask 1039360
        %v717 = vsel %vm716, %v709, %v711
        %v718 = vsel %vm716, %v711, %v713
        %v719 = vsel %vm716, %v713, %v715
        %723 = vst [vmem:[#allocation3 + $0x18] sm:$0xff] %v717
        %724 = vst [vmem:[#allocation3 + $0x20] sm:$0xff] %v718
        %725 = vst [vmem:[#allocation3 + $0x28] sm:$0xff] %v719
        %v726 = vld [vmem:[#allocation2] sm:$0xff]
        %v727 = vld [vmem:[#allocation2 + $0x8] sm:$0xff]
        %v728 = vld [vmem:[#allocation2 + $0x10] sm:$0xff]
        %v729 = vld [vmem:[#allocation2 + $0x18] sm:$0xff]
        %734 = vrot.lane.b32.xlu0 %v726, 126
        %v735 = vpop.permute.xlu0 %734
        %736 = vrot.lane.b32.xlu0 %v727, 126
        %v737 = vpop.permute.xlu0 %736
        %738 = vrot.lane.b32.xlu0 %v728, 126
        %v739 = vpop.permute.xlu0 %738
        %740 = vrot.lane.b32.xlu0 %v729, 126
        %v741 = vpop.permute.xlu0 %740
        %vm742 = vcmask 1031168
        %v743 = vsel %vm742, %v735, %v737
        %v744 = vsel %vm742, %v737, %v739
        %v745 = vsel %vm742, %v739, %v741
        %749 = vst [vmem:[#allocation3 + $0x30] sm:$0xff] %v743
        %750 = vst [vmem:[#allocation3 + $0x38] sm:$0xff] %v744
        %751 = vst [vmem:[#allocation3 + $0x40] sm:$0xff] %v745
        %v752 = vld [vmem:[#allocation2] sm:$0xff]
        %v753 = vld [vmem:[#allocation2 + $0x8] sm:$0xff]
        %v754 = vld [vmem:[#allocation2 + $0x10] sm:$0xff]
        %v755 = vld [vmem:[#allocation2 + $0x18] sm:$0xff]
        %760 = vrot.lane.b32.xlu0 %v752, 110
        %v761 = vpop.permute.xlu0 %760
        %762 = vrot.lane.b32.xlu0 %v753, 110
        %v763 = vpop.permute.xlu0 %762
        %764 = vrot.lane.b32.xlu0 %v754, 110
        %v765 = vpop.permute.xlu0 %764
        %766 = vrot.lane.b32.xlu0 %v755, 110
        %v767 = vpop.permute.xlu0 %766
        %vm768 = vcmask 900096
        %v769 = vsel %vm768, %v761, %v763
        %v770 = vsel %vm768, %v763, %v765
        %v771 = vsel %vm768, %v765, %v767
        %775 = vst [vmem:[#allocation3 + $0x48] sm:$0xff] %v769
        %776 = vst [vmem:[#allocation3 + $0x50] sm:$0xff] %v770
        %777 = vst [vmem:[#allocation3 + $0x58] sm:$0xff] %v771
        %v778 = vld [vmem:[#allocation2] sm:$0xff]
        %v779 = vld [vmem:[#allocation2 + $0x8] sm:$0xff]
        %v780 = vld [vmem:[#allocation2 + $0x10] sm:$0xff]
        %v781 = vld [vmem:[#allocation2 + $0x18] sm:$0xff]
        %786 = vrot.lane.b32.xlu0 %v778, 109
        %v787 = vpop.permute.xlu0 %786
        %788 = vrot.lane.b32.xlu0 %v779, 109
        %v789 = vpop.permute.xlu0 %788
        %790 = vrot.lane.b32.xlu0 %v780, 109
        %v791 = vpop.permute.xlu0 %790
        %792 = vrot.lane.b32.xlu0 %v781, 109
        %v793 = vpop.permute.xlu0 %792
        %vm794 = vcmask 891904
        %v795 = vsel %vm794, %v787, %v789
        %v796 = vsel %vm794, %v789, %v791
        %v797 = vsel %vm794, %v791, %v793
        %801 = vst [vmem:[#allocation3 + $0x60] sm:$0xff] %v795
        %802 = vst [vmem:[#allocation3 + $0x68] sm:$0xff] %v796
        %803 = vst [vmem:[#allocation3 + $0x70] sm:$0xff] %v797
        %v804 = vld [vmem:[#allocation2] sm:$0xff]
        %v805 = vld [vmem:[#allocation2 + $0x8] sm:$0xff]
        %v806 = vld [vmem:[#allocation2 + $0x10] sm:$0xff]
        %v807 = vld [vmem:[#allocation2 + $0x18] sm:$0xff]
        %812 = vrot.lane.b32.xlu0 %v804, 108
        %v813 = vpop.permute.xlu0 %812
        %814 = vrot.lane.b32.xlu0 %v805, 108
        %v815 = vpop.permute.xlu0 %814
        %816 = vrot.lane.b32.xlu0 %v806, 108
        %v817 = vpop.permute.xlu0 %816
        %818 = vrot.lane.b32.xlu0 %v807, 108
        %v819 = vpop.permute.xlu0 %818
        %vm820 = vcmask 883712
        %v821 = vsel %vm820, %v813, %v815
        %v822 = vsel %vm820, %v815, %v817
        %v823 = vsel %vm820, %v817, %v819
        %827 = vst [vmem:[#allocation3 + $0x78] sm:$0xff] %v821
        %828 = vst [vmem:[#allocation3 + $0x80] sm:$0xff] %v822
        %829 = vst [vmem:[#allocation3 + $0x88] sm:$0xff] %v823
        %v830 = vld [vmem:[#allocation2] sm:$0xff]
        %v831 = vld [vmem:[#allocation2 + $0x8] sm:$0xff]
        %v832 = vld [vmem:[#allocation2 + $0x10] sm:$0xff]
        %v833 = vld [vmem:[#allocation2 + $0x18] sm:$0xff]
        %838 = vrot.lane.b32.xlu0 %v830, 92
        %v839 = vpop.permute.xlu0 %838
        %840 = vrot.lane.b32.xlu0 %v831, 92
        %v841 = vpop.permute.xlu0 %840
        %842 = vrot.lane.b32.xlu0 %v832, 92
        %v843 = vpop.permute.xlu0 %842
        %844 = vrot.lane.b32.xlu0 %v833, 92
        %v845 = vpop.permute.xlu0 %844
        %vm846 = vcmask 752640
        %v847 = vsel %vm846, %v839, %v841
        %v848 = vsel %vm846, %v841, %v843
        %v849 = vsel %vm846, %v843, %v845
        %853 = vst [vmem:[#allocation3 + $0x90] sm:$0xff] %v847
        %854 = vst [vmem:[#allocation3 + $0x98] sm:$0xff] %v848
        %855 = vst [vmem:[#allocation3 + $0xa0] sm:$0xff] %v849
        %v856 = vld [vmem:[#allocation2] sm:$0xff]
        %v857 = vld [vmem:[#allocation2 + $0x8] sm:$0xff]
        %v858 = vld [vmem:[#allocation2 + $0x10] sm:$0xff]
        %v859 = vld [vmem:[#allocation2 + $0x18] sm:$0xff]
        %864 = vrot.lane.b32.xlu0 %v856, 91
        %v865 = vpop.permute.xlu0 %864
        %866 = vrot.lane.b32.xlu0 %v857, 91
        %v867 = vpop.permute.xlu0 %866
        %868 = vrot.lane.b32.xlu0 %v858, 91
        %v869 = vpop.permute.xlu0 %868
        %870 = vrot.lane.b32.xlu0 %v859, 91
        %v871 = vpop.permute.xlu0 %870
        %vm872 = vcmask 744448
        %v873 = vsel %vm872, %v865, %v867
        %v874 = vsel %vm872, %v867, %v869
        %v875 = vsel %vm872, %v869, %v871
        %879 = vst [vmem:[#allocation3 + $0xa8] sm:$0xff] %v873
        %880 = vst [vmem:[#allocation3 + $0xb0] sm:$0xff] %v874
        %881 = vst [vmem:[#allocation3 + $0xb8] sm:$0xff] %v875
        %v882 = vld [vmem:[#allocation2] sm:$0xff]
        %v883 = vld [vmem:[#allocation2 + $0x8] sm:$0xff]
        %v884 = vld [vmem:[#allocation2 + $0x10] sm:$0xff]
        %v885 = vld [vmem:[#allocation2 + $0x18] sm:$0xff]
        %890 = vrot.lane.b32.xlu0 %v882, 90
        %v891 = vpop.permute.xlu0 %890
        %892 = vrot.lane.b32.xlu0 %v883, 90
        %v893 = vpop.permute.xlu0 %892
        %894 = vrot.lane.b32.xlu0 %v884, 90
        %v895 = vpop.permute.xlu0 %894
        %896 = vrot.lane.b32.xlu0 %v885, 90
        %v897 = vpop.permute.xlu0 %896
        %vm898 = vcmask 736256
        %v899 = vsel %vm898, %v891, %v893
        %v900 = vsel %vm898, %v893, %v895
        %v901 = vsel %vm898, %v895, %v897
        %905 = vst [vmem:[#allocation3 + $0xc0] sm:$0xff] %v899
        %906 = vst [vmem:[#allocation3 + $0xc8] sm:$0xff] %v900
        %907 = vst [vmem:[#allocation3 + $0xd0] sm:$0xff] %v901
        %v908 = vld [vmem:[%s2] sm:$0xff]
        %v909 = vld [vmem:[%s2 + $0x8] sm:$0xff]
        %v910 = vld [vmem:[#allocation3] sm:$0xff]
        %v911 = vld [vmem:[#allocation3 + $0x8] sm:$0xff]
        %v912 = vld [vmem:[#allocation3 + $0x10] sm:$0xff]
        %v913 = vld [vmem:[#allocation3 + $0x18] sm:$0xff]
        %v914 = vld [vmem:[#allocation3 + $0x20] sm:$0xff]
        %v915 = vld [vmem:[#allocation3 + $0x28] sm:$0xff]
        %v916 = vld [vmem:[#allocation3 + $0x30] sm:$0xff]
        %v917 = vld [vmem:[#allocation3 + $0x38] sm:$0xff]
        %v918 = vld [vmem:[#allocation3 + $0x40] sm:$0xff]
        %v919 = vld [vmem:[#allocation3 + $0x48] sm:$0xff]
        %v920 = vld [vmem:[#allocation3 + $0x50] sm:$0xff]
        %v921 = vld [vmem:[#allocation3 + $0x58] sm:$0xff]
        %v922 = vld [vmem:[#allocation3 + $0x60] sm:$0xff]
        %v923 = vld [vmem:[#allocation3 + $0x68] sm:$0xff]
        %v924 = vld [vmem:[#allocation3 + $0x70] sm:$0xff]
        %v925 = vld [vmem:[#allocation3 + $0x78] sm:$0xff]
        %v926 = vld [vmem:[#allocation3 + $0x80] sm:$0xff]
        %v927 = vld [vmem:[#allocation3 + $0x88] sm:$0xff]
        %v928 = vld [vmem:[#allocation3 + $0x90] sm:$0xff]
        %v929 = vld [vmem:[#allocation3 + $0x98] sm:$0xff]
        %v930 = vld [vmem:[#allocation3 + $0xa0] sm:$0xff]
        %v931 = vld [vmem:[#allocation3 + $0xa8] sm:$0xff]
        %v932 = vld [vmem:[#allocation3 + $0xb0] sm:$0xff]
        %v933 = vld [vmem:[#allocation3 + $0xb8] sm:$0xff]
        %v934 = vld [vmem:[#allocation3 + $0xc0] sm:$0xff]
        %v935 = vld [vmem:[#allocation3 + $0xc8] sm:$0xff]
        %v936 = vld [vmem:[#allocation3 + $0xd0] sm:$0xff]
        %v939 = vunpack.c.l.b16 %v908
        %v940 = vunpack.c.h.b16 %v908
        %v941 = vunpack.c.l.b16 %v909
        %v942 = vunpack.c.h.b16 %v909
        %v943 = vpack.c.b16 %v941, %v939
        %v944 = vpack.c.b16 %v942, %v940
        %vm946 = vcmask 130048
        %v948 = vsel %vm946, %v944, 0
        %950 = vmatprep.subr.bf16.mxu0 %v911
        %951 = vmatpush1.bf16.msra.mxu0 %v910
        %952 = vmatprep.subr.bf16.mxu0 %v914
        %953 = vmatpush1.bf16.msra.mxu0 %v913
        %954 = vmatprep.subr.bf16.mxu0 %v917
        %955 = vmatpush1.bf16.msra.mxu0 %v916
        %956 = vmatprep.subr.bf16.mxu0 %v920
        %957 = vmatpush1.bf16.msra.mxu0 %v919
        %958 = vmatprep.subr.bf16.mxu0 %v923
        %959 = vmatpush1.bf16.msra.mxu0 %v922
        %960 = vmatprep.subr.bf16.mxu0 %v926
        %961 = vmatpush1.bf16.msra.mxu0 %v925
        %962 = vmatprep.subr.bf16.mxu0 %v929
        %963 = vmatpush1.bf16.msra.mxu0 %v928
        %964 = vmatprep.subr.bf16.mxu0 %v932
        %965 = vmatpush1.bf16.msra.mxu0 %v931
        %966 = vmatprep.subr.bf16.mxu0 %v935
        %967 = vmatpush1.bf16.msra.mxu0 %v934
        %968 = vmatprep.subr.bf16.mxu0 0
        %969 = vmatpush1.bf16.msra.mxu0 0
        %970 = vmatprep.subr.bf16.mxu0 0
        %971 = vmatpush1.bf16.msra.mxu0 0
        %972 = vmatprep.subr.bf16.mxu0 0
        %973 = vmatpush1.bf16.msra.mxu0 0
        %974 = vmatprep.subr.bf16.mxu0 0
        %975 = vmatpush1.bf16.msra.mxu0 0
        %976 = vmatprep.subr.bf16.mxu0 0
        %977 = vmatpush1.bf16.msra.mxu0 0
        %978 = vmatprep.subr.bf16.mxu0 0
        %979 = vmatpush1.bf16.msra.mxu0 0
        %980 = vmatprep.subr.bf16.mxu0 0
        %981 = vmatpush1.bf16.msra.mxu0 0
        %982 = vmatprep.mubr.bf16.mxu0 %v948
        %983 = vmatmul.mubr.bf16.gmra.mrb[0].mxu0 %v943
        %v984 = vpop.f32.mrb[0].mxu0
        %v985 = vadd.f32 0.0, %v984
        %v986 = vpop.f32.mrb[0].mxu0
        %v987 = vadd.f32 0.0, %v986
        %v988 = vpop.f32.mrb[0].mxu0
        %v989 = vadd.f32 0.0, %v988
        %v990 = vpop.f32.mrb[0].mxu0
        %v991 = vadd.f32 0.0, %v990
        %992 = vdwg.mxu0
        %993 = vmatprep.subr.bf16.mxu0 0
        %994 = vmatpush1.bf16.msra.mxu0 %v912
        %995 = vmatprep.subr.bf16.mxu0 0
        %996 = vmatpush1.bf16.msra.mxu0 %v915
        %997 = vmatprep.subr.bf16.mxu0 0
        %998 = vmatpush1.bf16.msra.mxu0 %v918
        %999 = vmatprep.subr.bf16.mxu0 0
        %1000 = vmatpush1.bf16.msra.mxu0 %v921
        %1001 = vmatprep.subr.bf16.mxu0 0
        %1002 = vmatpush1.bf16.msra.mxu0 %v924
        %1003 = vmatprep.subr.bf16.mxu0 0
        %1004 = vmatpush1.bf16.msra.mxu0 %v927
        %1005 = vmatprep.subr.bf16.mxu0 0
        %1006 = vmatpush1.bf16.msra.mxu0 %v930
        %1007 = vmatprep.subr.bf16.mxu0 0
        %1008 = vmatpush1.bf16.msra.mxu0 %v933
        %1009 = vmatprep.subr.bf16.mxu0 0
        %1010 = vmatpush1.bf16.msra.mxu0 %v936
        %1011 = vmatprep.subr.bf16.mxu0 0
        %1012 = vmatpush1.bf16.msra.mxu0 0
        %1013 = vmatprep.subr.bf16.mxu0 0
        %1014 = vmatpush1.bf16.msra.mxu0 0
        %1015 = vmatprep.subr.bf16.mxu0 0
        %1016 = vmatpush1.bf16.msra.mxu0 0
        %1017 = vmatprep.subr.bf16.mxu0 0
        %1018 = vmatpush1.bf16.msra.mxu0 0
        %1019 = vmatprep.subr.bf16.mxu0 0
        %1020 = vmatpush1.bf16.msra.mxu0 0
        %1021 = vmatprep.subr.bf16.mxu0 0
        %1022 = vmatpush1.bf16.msra.mxu0 0
        %1023 = vmatprep.subr.bf16.mxu0 0
        %1024 = vmatpush1.bf16.msra.mxu0 0
        %1025 = vmatprep.mubr.bf16.mxu0 %v948
        %1026 = vmatmul.mubr.bf16.gmra.mrb[0].mxu0 %v943
        %v1027 = vpop.f32.mrb[0].mxu0
        %v1028 = vadd.f32 0.0, %v1027
        %v1029 = vpop.f32.mrb[0].mxu0
        %v1030 = vpop.f32.mrb[0].mxu0
        %v1031 = vadd.f32 0.0, %v1030
        %v1032 = vpop.f32.mrb[0].mxu0
        %1033 = vdwg.mxu0
        %1034 = vst [vmem:[%s652] sm:$0xff] %v985
        %1035 = vst [vmem:[%s652 + $0x8] sm:$0xff] %v987
        %1036 = vst [vmem:[%s652 + $0x10] sm:$0xff] %v1028
        %1037 = vst [vmem:[%s652 + $0x18] sm:$0xff] %v989
        %1038 = vst [vmem:[%s652 + $0x20] sm:$0xff] %v991
        %1039 = vst [vmem:[%s652 + $0x28] sm:$0xff] %v1031
        %s1040 = sand.u32 %s99, 1
        %s1041 = sand.u32 %s99, 1
        %s1042 = smul.addr %s1041, 48
        %s1043 = scalar_lea.vmem [#allocation6], %s1042
        // Predicated region
        $region140: #{pconv2_1.1} parent=130 // pred_check
          %p1044 = pneg %p109
        $region141: #{pconv2_1.1} parent=130 // pred_check_branch
          %1046 = sbr.rel (%p1044) target = $region143
        $region142: #{pconv2_1.1} parent=130 // pred_region
          %s1047 = smul.u32 3, %s14
          %s1048 = smul.addr %s1047, 8
          %s1049 = scalar_lea.vmem %s3, %s1048
          // Predicated region
          $region144: #{pconv2_1.1} parent=142 // pred_check
            _
          $region145: #{pconv2_1.1} parent=142 // pred_check_branch
            %1051 = sbr.rel (0) target = $region147
          $region146: #{pconv2_1.1} parent=142 // pred_region
            // Predicated region
            $region148: #{pconv2_1.1} parent=146 // pred_check
              _
            $region149: #{pconv2_1.1} parent=146 // pred_check_branch
              %1053 = sbr.rel (0) target = $region151
            $region150: #{pconv2_1.1} parent=146 // pred_region
              loop: start=0, step=1, limit=1
              $region152: #{pconv2_1.1} parent=150 // loop_pre_header
                _
              $region153: #{pconv2_1.1} parent=150 // loop_header
                %s1055 = sphi 0, %s1059
                %p1056 = scmp.ge.s32.totalorder %s1055, 1
                %s1060 = sphi %s1043, %s1043
                %s1061 = sphi %s1049, %s1049
              $region154: #{pconv2_1.1} parent=150 // loop_header_branch
                %1058 = sbr.rel (%p1056) target = $region158
              $region155: #{pconv2_1.1} parent=150 // loop_body
                %v1062 = vld [vmem:[%s1060] sm:$0xff]
                %1063 = vst [vmem:[%s1061] sm:$0xff] %v1062
                %v1064 = vld [vmem:[%s1060 + $0x8] sm:$0xff]
                %1065 = vst [vmem:[%s1061 + $0x8] sm:$0xff] %v1064
                %v1066 = vld [vmem:[%s1060 + $0x10] sm:$0xff]
                %1067 = vst [vmem:[%s1061 + $0x10] sm:$0xff] %v1066
                %v1068 = vld [vmem:[%s1060 + $0x18] sm:$0xff]
                %1069 = vst [vmem:[%s1061 + $0x30] sm:$0xff] %v1068
                %v1070 = vld [vmem:[%s1060 + $0x20] sm:$0xff]
                %1071 = vst [vmem:[%s1061 + $0x38] sm:$0xff] %v1070
                %v1072 = vld [vmem:[%s1060 + $0x28] sm:$0xff]
                %1073 = vst [vmem:[%s1061 + $0x40] sm:$0xff] %v1072
              $region156: #{pconv2_1.1} parent=150 // loop_footer
                %s1059 = sadd.s32 1, %s1055
              $region157: #{pconv2_1.1} parent=150 // loop_footer_branch
                %1054 = sbr.rel target = $region153
              $region158: #{pconv2_1.1} parent=150 // loop_exit
                _
            $region151: #{pconv2_1.1} parent=146 // pred_fallthru
              _
            // Predicated region
            $region159: #{pconv2_1.1} parent=146 // pred_check
              _
            $region160: #{pconv2_1.1} parent=146 // pred_check_branch
              %1075 = sbr.rel target = $region162
            $region161: #{pconv2_1.1} parent=146 // pred_region
              _
            $region162: #{pconv2_1.1} parent=146 // pred_fallthru
              _
          $region147: #{pconv2_1.1} parent=142 // pred_fallthru
            _
          %1076 = vnop
        $region143: #{pconv2_1.1} parent=130 // pred_fallthru
          _
      $region131: #{pconv2_1.1} parent=5 // pred_fallthru
        _
      %p1077 = scmp.le.s32.totalorder 2, %s9
      // Predicated region
      $region163: #{pconv2_1.1} parent=5 // pred_check
        %p1078 = pneg %p1077
      $region164: #{pconv2_1.1} parent=5 // pred_check_branch
        %1080 = sbr.rel (%p1078) target = $region166
      $region165: #{pconv2_1.1} parent=5 // pred_region
        %s1081 = ssub.s32 %s9, 2
        // Predicated region
        $region167: #{pconv2_1.1} parent=165 // pred_check
          %p1082 = pneg %p115
        $region168: #{pconv2_1.1} parent=165 // pred_check_branch
          %1084 = sbr.rel (%p1082) target = $region170
        $region169: #{pconv2_1.1} parent=165 // pred_region
          %s1085 = sand.u32 %s100, 1
          %s1086 = sand.u32 %s100, 1
          %s1087 = smul.addr %s1086, 48
          %s1088 = scalar_lea.vmem [#allocation6], %s1087
        $region170: #{pconv2_1.1} parent=165 // pred_fallthru
          _
      $region166: #{pconv2_1.1} parent=5 // pred_fallthru
        _
    $region6: #{pconv2_1.1} parent=1 // loop_footer
      %s13 = sadd.s32 1, %s9
    $region7: #{pconv2_1.1} parent=1 // loop_footer_branch
      %8 = sbr.rel target = $region3
    $region8: #{pconv2_1.1} parent=1 // loop_exit
      _

</llo_original>
